<compile_context>
chip_gen: v6e
topology: v6e:2x2x1
jax: 0.10.0
libtpu: 0.0.40
codegen_flags: <defaults>
</compile_context>

<pallas_src>
import functools

import jax
import jax.numpy as jnp
from jax.experimental import pallas as pl
from jax.experimental.pallas import tpu as pltpu

LN_EPS = 1e-5  # torch.nn.LayerNorm default eps


# ------------------------------ kernels ------------------------------------

def _dccatt_kernel(x_ref, pre_ref, convw_ref, convb_ref, gamma_ref, beta_ref,
                   fcwT_ref, fcb_ref, att_ref, out_ref, acc_ref, *, inv_hw):
    """Branch with pre_Catt != None.  Grid = (batch_tiles, hw_tiles)."""
    k = pl.program_id(1)

    # Streaming phase: lane-reduce this x tile into a (tile_b, c) f32 partial.
    # No explicit zero-init pass: the first hw step writes, later steps add.
    partial = jnp.sum(x_ref[...].astype(jnp.float32), axis=-1)   # (tb, c)

    @pl.when(k == 0)
    def _first():
        acc_ref[...] = partial

    @pl.when(k > 0)
    def _accumulate():
        acc_ref[...] += partial

    @pl.when(k == pl.num_programs(1) - 1)
    def _epilogue():
        gap = acc_ref[...] * inv_hw                              # (tb, c)
        pre = pre_ref[...].astype(jnp.float32)                   # (tb, c)

        # Conv2d(2, 1, kernel_size=1) over the stacked (gap, pre) "channels".
        z = convw_ref[0] * gap + convw_ref[1] * pre + convb_ref[0]

        # LayerNorm(channels) over the channel axis, biased variance.
        mu = jnp.mean(z, axis=-1, keepdims=True)
        var = jnp.mean((z - mu) * (z - mu), axis=-1, keepdims=True)
        y = (z - mu) * jax.lax.rsqrt(var + LN_EPS)
        y = y * gamma_ref[...] + beta_ref[...]
        y = jnp.maximum(y, 0.0)                                  # ReLU

        # fc = Conv2d(c, c, 1, bias=True) on (b, c, 1, 1)  ==  y @ W.T + b.
        logits = jnp.dot(y, fcwT_ref[...],
                         preferred_element_type=jnp.float32) + fcb_ref[...]
        att = jax.nn.sigmoid(logits)                             # (tb, c)

        att_ref[...] = att.astype(att_ref.dtype)
        out_ref[...] = (gap * att).astype(out_ref.dtype)


def _dccatt_nopre_kernel(x_ref, fcwT_ref, fcb_ref, att_ref, out_ref, acc_ref,
                         *, inv_hw):
    """Branch with pre_Catt is None (GAP -> fc -> sigmoid -> gate)."""
    k = pl.program_id(1)
    partial = jnp.sum(x_ref[...].astype(jnp.float32), axis=-1)   # (tb, c)

    @pl.when(k == 0)
    def _first():
        acc_ref[...] = partial

    @pl.when(k > 0)
    def _accumulate():
        acc_ref[...] += partial

    @pl.when(k == pl.num_programs(1) - 1)
    def _epilogue():
        gap = acc_ref[...] * inv_hw
        logits = jnp.dot(gap, fcwT_ref[...],
                         preferred_element_type=jnp.float32) + fcb_ref[...]
        att = jax.nn.sigmoid(logits)
        att_ref[...] = att.astype(att_ref.dtype)
        out_ref[...] = (gap * att).astype(out_ref.dtype)


# ------------------------------ tiling helpers -------------------------------

def _vmem_capacity_bytes():
    """Per-core VMEM capacity; conservative (v7x, 64 MiB) fallback on failure."""
    try:
        return int(pltpu.get_tpu_info().vmem_capacity_bytes)
    except Exception:
        return 64 << 20


def _pick_tile_b(b, num_cores=2):
    """Batch tile: a multiple of 8 that divides b (or the full batch), as large
    as possible up to 64 rows while keeping >= num_cores parallel tiles so both
    v7x TensorCores get work on the 'parallel' grid axis."""
    if b % 8 != 0:
        # TODO(synk): for tiny b on v7x, hw could be split across the two cores
        # with per-core partial GAPs + a combine pass; not implemented here.
        return b
    cands = [d for d in range(8, min(b, 64) + 1, 8) if b % d == 0]
    parallel = [d for d in cands if b // d >= num_cores]
    return max(parallel) if parallel else max(cands)


def _pick_tile_hw(hw, tile_b, c, itemsize, x_budget_bytes):
    """Largest lane-dense (multiple-of-128) divisor of hw whose DOUBLE-BUFFERED
    x tile fits the budget.  Measured HBM roofline strongly favors >= 512 lane
    tiles, so the no-budget fallback also prefers larger divisors."""
    for cand in (2048, 1024, 512, 256, 128):
        if hw % cand == 0 and 2 * tile_b * c * cand * itemsize <= x_budget_bytes:
            return cand
    for cand in (512, 256, 128):
        if hw % cand == 0:
            return cand
    return hw  # full extent is always a legal block dim


# ------------------------------ wrapper -------------------------------------

def dccatt_forward(x0, pre_catt, params):
    """Pallas implementation of DCCAtt.forward([x0, pre_catt])."""
    b, c, h, w = x0.shape
    hw = h * w
    x = x0.reshape(b, c, hw)                      # lane-dense spatial axis

    vmem_cap = _vmem_capacity_bytes()
    tile_b = _pick_tile_b(b)
    tile_hw = _pick_tile_hw(hw, tile_b, c, x0.dtype.itemsize,
                            x_budget_bytes=vmem_cap // 4)
    assert b % tile_b == 0 and hw % tile_hw == 0, "tile pickers must divide"
    grid = (b // tile_b, hw // tile_hw)
    hw_steps = grid[1]

    # fc weight is expected pre-transposed (hoisted out of the per-call path);
    # fall back to transposing here if the caller did not provide it.
    fc_wT = params.get("fc_wT")
    if fc_wT is None:
        fc_wT = params["fc_w"].T                  # (c_in, c_out)
    fc_b2 = params["fc_b"].reshape(1, c)

    # Extra x buffering only pays off when tiles are small and there are
    # enough hw steps for the DMA engine to run ahead of (v7x short DMAs).
    x_buffers = 3 if (tile_hw <= 256 and hw_steps > 2) else 2

    out_shapes = (jax.ShapeDtypeStruct((b, c), x0.dtype),
                  jax.ShapeDtypeStruct((b, c), x0.dtype))

    acc_scratch = pltpu.VMEM((tile_b, c), jnp.float32)   # tiny GAP accumulator

    # VMEM budget: multi-buffered x tile + resident params + tiny acc / outs.
    x_tile_bytes = tile_b * c * tile_hw * x0.dtype.itemsize
    resident_bytes = c * c * 4 + 8 * c * 4 + 6 * tile_b * c * 4
    vmem_needed = x_buffers * x_tile_bytes + resident_bytes + (2 << 20)
    vmem_limit = int(min(max(vmem_needed, 16 << 20), (vmem_cap * 3) // 4))

    compiler_params = pltpu.CompilerParams(
        dimension_semantics=("parallel", "arbitrary"),
        vmem_limit_bytes=vmem_limit)

    cost = pl.CostEstimate(
        flops=int(b * c * hw + 2 * b * c * c + 8 * b * c),
        transcendentals=int(2 * b * c),
        bytes_accessed=int(x.size * x.dtype.itemsize + c * c * 4
                           + 6 * b * c * 4))

    def run(use_pipeline_mode):
        def spec(shape, index_map, buffers=None):
            kwargs = {}
            if use_pipeline_mode and buffers is not None and buffers != 2:
                kwargs["pipeline_mode"] = pl.Buffered(buffers)
            return pl.BlockSpec(shape, index_map, **kwargs)

        # x streams over (batch tile, hw tile); everything else stays resident
        # (constant index maps, single-buffered).
        x_spec = spec((tile_b, c, tile_hw), lambda i, k: (i, 0, k),
                      buffers=x_buffers)
        row_spec = spec((tile_b, c), lambda i, k: (i, 0))           # pre_Catt
        fcw_spec = spec((c, c), lambda i, k: (0, 0), buffers=1)     # fc weight
        vec_spec = spec((1, c), lambda i, k: (0, 0), buffers=1)     # bias/LN
        smem_spec = lambda n: pl.BlockSpec(
            (n,), lambda i, k: (0,), memory_space=pltpu.MemorySpace.SMEM)
        out_specs = (pl.BlockSpec((tile_b, c), lambda i, k: (i, 0)),
                     pl.BlockSpec((tile_b, c), lambda i, k: (i, 0)))

        if pre_catt is None:
            kernel = functools.partial(_dccatt_nopre_kernel, inv_hw=1.0 / hw)
            return pl.pallas_call(
                kernel,
                out_shape=out_shapes,
                grid=grid,
                in_specs=[x_spec, fcw_spec, vec_spec],
                out_specs=out_specs,
                scratch_shapes=[acc_scratch],
                compiler_params=compiler_params,
                cost_estimate=cost,
            )(x, fc_wT, fc_b2)

        kernel = functools.partial(_dccatt_kernel, inv_hw=1.0 / hw)
        return pl.pallas_call(
            kernel,
            out_shape=out_shapes,
            grid=grid,
            in_specs=[x_spec, row_spec,
                      smem_spec(2), smem_spec(1),
                      vec_spec, vec_spec,
                      fcw_spec, vec_spec],
            out_specs=out_specs,
            scratch_shapes=[acc_scratch],
            compiler_params=compiler_params,
            cost_estimate=cost,
        )(x, pre_catt.reshape(b, c),
          params["conv_w"], params["conv_b"],
          params["ln_gamma"].reshape(1, c), params["ln_beta"].reshape(1, c),
          fc_wT, fc_b2)

    try:
        att, out = run(True)
    except Exception:
        # Fallback for jax builds without BlockSpec pipeline_mode support.
        att, out = run(False)

    return [att.reshape(b, c, 1, 1), out]


# ------------------------------ reference -----------------------------------

def dccatt_ref(x0, pre_catt, params):
    """Pure-JAX reference mirroring the PyTorch forward."""
    b, c, h, w = x0.shape
    gap = jnp.mean(x0.astype(jnp.float32), axis=(2, 3))       # (b, c)
    if pre_catt is None:
        att = jax.nn.sigmoid(gap @ params["fc_w"].T + params["fc_b"])
    else:
        z = (params["conv_w"][0] * gap
             + params["conv_w"][1] * pre_catt.reshape(b, c)
             + params["conv_b"][0])
        mu = jnp.mean(z, axis=-1, keepdims=True)
        var = jnp.mean((z - mu) ** 2, axis=-1, keepdims=True)
        y = (z - mu) / jnp.sqrt(var + LN_EPS)
        y = y * params["ln_gamma"] + params["ln_beta"]
        y = jnp.maximum(y, 0.0)
        att = jax.nn.sigmoid(y @ params["fc_w"].T + params["fc_b"])
    return [att.reshape(b, c, 1, 1), gap * att]


# ------------------------------ main -----------------------------------------

def _make_params(key, c):
    k1, k2, k3, k4, k5, k6 = jax.random.split(key, 6)
    fc_w = 0.2 * jax.random.normal(k1, (c, c), dtype=jnp.float32)
    return {
        # fc = Conv2d(c, c, 1, bias=True): weight (c, c, 1, 1) -> (c, c), bias (c,)
        "fc_w": fc_w,
        "fc_wT": fc_w.T,   # hoisted transpose: computed once at param build time
        "fc_b": 0.1 * jax.random.normal(k2, (c,), dtype=jnp.float32),
        # conv[0] = Conv2d(2, 1, 1): weight (1, 2, 1, 1) -> (2,), bias (1,)
        "conv_w": 0.5 * jax.random.normal(k3, (2,), dtype=jnp.float32),
        "conv_b": 0.1 * jax.random.normal(k4, (1,), dtype=jnp.float32),
        # conv[1] = LayerNorm(c): weight (c,), bias (c,)
        "ln_gamma": 1.0 + 0.1 * jax.random.normal(k5, (c,), dtype=jnp.float32),
        "ln_beta": 0.1 * jax.random.normal(k6, (c,), dtype=jnp.float32),
    }


def _check(name, got, want, rtol=1e-4, atol=1e-5):
    assert jnp.allclose(got, want, rtol=rtol, atol=atol), f"{name} mismatch"


def _run_case(key, b, c, h, w, use_pre):
    kx, kp, kpar = jax.random.split(key, 3)
    x0 = jax.random.normal(kx, (b, c, h, w), dtype=jnp.float32)
    pre = (jax.random.normal(kp, (b, c), dtype=jnp.float32) if use_pre else None)
    params = _make_params(kpar, c)

    att, out = dccatt_forward(x0, pre, params)
    jax.block_until_ready(att)
    jax.block_until_ready(out)
    ratt, rout = dccatt_ref(x0, pre, params)
    tag = f"b={b},c={c},h={h},w={w},pre={use_pre}"
    _check(f"att ({tag})", att, ratt)
    _check(f"out ({tag})", out, rout)


if __name__ == "__main__":
    key = jax.random.PRNGKey(0)
    k0, k1, k2, k3 = jax.random.split(key, 4)

    # Base small shape from the spec: single-tile grid, both branches.
    _run_case(k0, b=2, c=4, h=16, w=16, use_pre=True)
    _run_case(k1, b=2, c=4, h=16, w=16, use_pre=False)

    # Multi hw-tile accumulation path (hw=4096 -> two 2048-lane tiles).
    _run_case(k2, b=2, c=8, h=64, w=64, use_pre=True)

    # Multi batch-tile path (b=16 -> two batch tiles on the parallel axis).
    _run_case(k3, b=16, c=8, h=16, w=16, use_pre=False)

    print("KERNEL_OK")
</pallas_src>

<mosaic_0001>
module attributes {stable_mosaic.version = 11 : i64} {
  func.func @_dccatt_kernel(%arg0: i32, %arg1: i32, %arg2: memref<2x4x256xf32, #tpu.memory_space<vmem>>, %arg3: memref<2x4xf32, #tpu.memory_space<vmem>>, %arg4: memref<2xf32, #tpu.memory_space<smem>>, %arg5: memref<1xf32, #tpu.memory_space<smem>>, %arg6: memref<1x4xf32, #tpu.memory_space<vmem>>, %arg7: memref<1x4xf32, #tpu.memory_space<vmem>>, %arg8: memref<4x4xf32, #tpu.memory_space<vmem>>, %arg9: memref<1x4xf32, #tpu.memory_space<vmem>>, %arg10: memref<2x4xf32, #tpu.memory_space<vmem>>, %arg11: memref<2x4xf32, #tpu.memory_space<vmem>>, %arg12: memref<2x4xf32, #tpu.memory_space<vmem>>) attributes {dimension_semantics = [#tpu.dimension_semantics<parallel>, #tpu.dimension_semantics<arbitrary>], iteration_bounds = array<i64: 1, 1>, scalar_prefetch = 0 : i64, scratch_operands = 1 : i64, tpu.core_type = #tpu.core_type<tc>, window_params = [{transform_indices = @transform_0, window_bounds = array<i64: 2, 4, 256>}, {transform_indices = @transform_1, window_bounds = array<i64: 2, 4>}, {transform_indices = @transform_2, window_bounds = array<i64: 2>}, {transform_indices = @transform_3, window_bounds = array<i64: 1>}, {pipeline_mode = #tpu.pipeline_mode<synchronous>, transform_indices = @transform_4, window_bounds = array<i64: 1, 4>}, {pipeline_mode = #tpu.pipeline_mode<synchronous>, transform_indices = @transform_5, window_bounds = array<i64: 1, 4>}, {pipeline_mode = #tpu.pipeline_mode<synchronous>, transform_indices = @transform_6, window_bounds = array<i64: 4, 4>}, {pipeline_mode = #tpu.pipeline_mode<synchronous>, transform_indices = @transform_7, window_bounds = array<i64: 1, 4>}, {transform_indices = @transform_8, window_bounds = array<i64: 2, 4>}, {transform_indices = @transform_9, window_bounds = array<i64: 2, 4>}]} {
    %c0 = arith.constant 0 : index
    %c0_0 = arith.constant 0 : index
    %c0_1 = arith.constant 0 : index
    %0 = vector.load %arg2[%c0, %c0_0, %c0_1] : memref<2x4x256xf32, #tpu.memory_space<vmem>>, vector<2x4x256xf32>
    %cst = arith.constant dense<0.000000e+00> : vector<2x4xf32>
    %1 = vector.multi_reduction <add>, %0, %cst [2] : vector<2x4x256xf32> to vector<2x4xf32>
    %c0_i32 = arith.constant 0 : i32
    %2 = arith.cmpi eq, %arg1, %c0_i32 : i32
    %3 = arith.extui %2 : i1 to i32
    %c0_i32_2 = arith.constant 0 : i32
    %4 = arith.cmpi ne, %3, %c0_i32_2 : i32
    scf.if %4 {
      %c0_7 = arith.constant 0 : index
      %c0_8 = arith.constant 0 : index
      %11 = vector.load %arg12[%c0_7, %c0_8] : memref<2x4xf32, #tpu.memory_space<vmem>>, vector<2x4xf32>
      tpu.vector_store %arg12[%c0_7, %c0_8], %1 {strides = array<i32>} : memref<2x4xf32, #tpu.memory_space<vmem>>, vector<2x4xf32>,
    } else {
    }
    %c0_i32_3 = arith.constant 0 : i32
    %5 = arith.cmpi sgt, %arg1, %c0_i32_3 : i32
    %6 = arith.extui %5 : i1 to i32
    %c0_i32_4 = arith.constant 0 : i32
    %7 = arith.cmpi ne, %6, %c0_i32_4 : i32
    scf.if %7 {
      %c0_7 = arith.constant 0 : index
      %c0_8 = arith.constant 0 : index
      %11 = vector.load %arg12[%c0_7, %c0_8] : memref<2x4xf32, #tpu.memory_space<vmem>>, vector<2x4xf32>
      %12 = arith.addf %11, %1 : vector<2x4xf32>
      %c0_9 = arith.constant 0 : index
      %c0_10 = arith.constant 0 : index
      %13 = vector.load %arg12[%c0_9, %c0_10] : memref<2x4xf32, #tpu.memory_space<vmem>>, vector<2x4xf32>
      tpu.vector_store %arg12[%c0_9, %c0_10], %12 {strides = array<i32>} : memref<2x4xf32, #tpu.memory_space<vmem>>, vector<2x4xf32>,
    } else {
    }
    %c0_i32_5 = arith.constant 0 : i32
    %8 = arith.cmpi eq, %arg1, %c0_i32_5 : i32
    %9 = arith.extui %8 : i1 to i32
    %c0_i32_6 = arith.constant 0 : i32
    %10 = arith.cmpi ne, %9, %c0_i32_6 : i32
    scf.if %10 {
      %c0_7 = arith.constant 0 : index
      %c0_8 = arith.constant 0 : index
      %11 = vector.load %arg12[%c0_7, %c0_8] : memref<2x4xf32, #tpu.memory_space<vmem>>, vector<2x4xf32>
      %cst_9 = arith.constant 3.906250e-03 : f32
      %12 = vector.broadcast %cst_9 : f32 to vector<2x4xf32>
      %13 = arith.mulf %11, %12 : vector<2x4xf32>
      %c0_10 = arith.constant 0 : index
      %c0_11 = arith.constant 0 : index
      %14 = vector.load %arg3[%c0_10, %c0_11] : memref<2x4xf32, #tpu.memory_space<vmem>>, vector<2x4xf32>
      %c0_12 = arith.constant 0 : index
      %15 = memref.load %arg4[%c0_12] : memref<2xf32, #tpu.memory_space<smem>>
      %16 = vector.broadcast %15 : f32 to vector<2x4xf32>
      %17 = arith.mulf %16, %13 : vector<2x4xf32>
      %c1 = arith.constant 1 : index
      %18 = memref.load %arg4[%c1] : memref<2xf32, #tpu.memory_space<smem>>
      %19 = vector.broadcast %18 : f32 to vector<2x4xf32>
      %20 = arith.mulf %19, %14 : vector<2x4xf32>
      %21 = arith.addf %17, %20 : vector<2x4xf32>
      %c0_13 = arith.constant 0 : index
      %22 = memref.load %arg5[%c0_13] : memref<1xf32, #tpu.memory_space<smem>>
      %23 = vector.broadcast %22 : f32 to vector<2x4xf32>
      %24 = arith.addf %21, %23 : vector<2x4xf32>
      %cst_14 = arith.constant dense<0.000000e+00> : vector<2xf32>
      %25 = vector.multi_reduction <add>, %24, %cst_14 [1] : vector<2x4xf32> to vector<2xf32>
      %26 = vector.shape_cast %25 : vector<2xf32> to vector<2x1xf32>
      %cst_15 = arith.constant 4.000000e+00 : f32
      %27 = vector.broadcast %cst_15 : f32 to vector<2x1xf32>
      %28 = arith.divf %26, %27 : vector<2x1xf32>
      %29 = vector.broadcast %28 : vector<2x1xf32> to vector<2x4xf32>
      %30 = arith.subf %24, %29 : vector<2x4xf32>
      %31 = vector.broadcast %28 : vector<2x1xf32> to vector<2x4xf32>
      %32 = arith.subf %24, %31 : vector<2x4xf32>
      %33 = arith.mulf %30, %32 : vector<2x4xf32>
      %cst_16 = arith.constant dense<0.000000e+00> : vector<2xf32>
      %34 = vector.multi_reduction <add>, %33, %cst_16 [1] : vector<2x4xf32> to vector<2xf32>
      %35 = vector.shape_cast %34 : vector<2xf32> to vector<2x1xf32>
      %cst_17 = arith.constant 4.000000e+00 : f32
      %36 = vector.broadcast %cst_17 : f32 to vector<2x1xf32>
      %37 = arith.divf %35, %36 : vector<2x1xf32>
      %38 = vector.broadcast %28 : vector<2x1xf32> to vector<2x4xf32>
      %39 = arith.subf %24, %38 : vector<2x4xf32>
      %cst_18 = arith.constant 9.99999974E-6 : f32
      %40 = vector.broadcast %cst_18 : f32 to vector<2x1xf32>
      %41 = arith.addf %37, %40 : vector<2x1xf32>
      %42 = math.rsqrt %41 : vector<2x1xf32>
      %43 = vector.broadcast %42 : vector<2x1xf32> to vector<2x4xf32>
      %44 = arith.mulf %39, %43 : vector<2x4xf32>
      %c0_19 = arith.constant 0 : index
      %c0_20 = arith.constant 0 : index
      %45 = vector.load %arg6[%c0_19, %c0_20] : memref<1x4xf32, #tpu.memory_space<vmem>>, vector<1x4xf32>
      %46 = vector.broadcast %45 : vector<1x4xf32> to vector<2x4xf32>
      %47 = arith.mulf %44, %46 : vector<2x4xf32>
      %c0_21 = arith.constant 0 : index
      %c0_22 = arith.constant 0 : index
      %48 = vector.load %arg7[%c0_21, %c0_22] : memref<1x4xf32, #tpu.memory_space<vmem>>, vector<1x4xf32>
      %49 = vector.broadcast %48 : vector<1x4xf32> to vector<2x4xf32>
      %50 = arith.addf %47, %49 : vector<2x4xf32>
      %cst_23 = arith.constant 0.000000e+00 : f32
      %51 = vector.broadcast %cst_23 : f32 to vector<2x4xf32>
      %52 = arith.maximumf %50, %51 : vector<2x4xf32>
      %c0_24 = arith.constant 0 : index
      %c0_25 = arith.constant 0 : index
      %53 = vector.load %arg8[%c0_24, %c0_25] : memref<4x4xf32, #tpu.memory_space<vmem>>, vector<4x4xf32>
      %cst_26 = arith.constant dense<0.000000e+00> : vector<2x4xf32>
      %54 = tpu.matmul %52, %53, %cst_26 {dimension_numbers = #tpu.dot_dimension_numbers<[1], [0], [0], [1], [0, 0, 1, 1], [], []>} : vector<2x4xf32>, vector<4x4xf32>, vector<2x4xf32> -> vector<2x4xf32>
      %c0_27 = arith.constant 0 : index
      %c0_28 = arith.constant 0 : index
      %55 = vector.load %arg9[%c0_27, %c0_28] : memref<1x4xf32, #tpu.memory_space<vmem>>, vector<1x4xf32>
      %56 = vector.broadcast %55 : vector<1x4xf32> to vector<2x4xf32>
      %57 = arith.addf %54, %56 : vector<2x4xf32>
      %58 = arith.negf %57 : vector<2x4xf32>
      %59 = math.exp %58 : vector<2x4xf32>
      %cst_29 = arith.constant 1.000000e+00 : f32
      %60 = vector.broadcast %cst_29 : f32 to vector<2x4xf32>
      %61 = arith.addf %60, %59 : vector<2x4xf32>
      %62 = arith.divf %60, %61 : vector<2x4xf32>
      %c0_30 = arith.constant 0 : index
      %c0_31 = arith.constant 0 : index
      %63 = vector.load %arg10[%c0_30, %c0_31] : memref<2x4xf32, #tpu.memory_space<vmem>>, vector<2x4xf32>
      tpu.vector_store %arg10[%c0_30, %c0_31], %62 {strides = array<i32>} : memref<2x4xf32, #tpu.memory_space<vmem>>, vector<2x4xf32>,
      %64 = arith.mulf %13, %62 : vector<2x4xf32>
      %c0_32 = arith.constant 0 : index
      %c0_33 = arith.constant 0 : index
      %65 = vector.load %arg11[%c0_32, %c0_33] : memref<2x4xf32, #tpu.memory_space<vmem>>, vector<2x4xf32>
      tpu.vector_store %arg11[%c0_32, %c0_33], %64 {strides = array<i32>} : memref<2x4xf32, #tpu.memory_space<vmem>>, vector<2x4xf32>,
    } else {
    }
    return
  }
  func.func @transform_0(%arg0: i32, %arg1: i32) -> (i32, i32, i32) {
    %c0_i32 = arith.constant 0 : i32
    %c0_i32_0 = arith.constant 0 : i32
    return %arg0, %c0_i32, %arg1 : i32, i32, i32
  }
  func.func @transform_1(%arg0: i32, %arg1: i32) -> (i32, i32) {
    %c0_i32 = arith.constant 0 : i32
    %c0_i32_0 = arith.constant 0 : i32
    return %arg0, %c0_i32 : i32, i32
  }
  func.func @transform_2(%arg0: i32, %arg1: i32) -> i32 {
    %c0_i32 = arith.constant 0 : i32
    %c0_i32_0 = arith.constant 0 : i32
    return %c0_i32 : i32
  }
  func.func @transform_3(%arg0: i32, %arg1: i32) -> i32 {
    %c0_i32 = arith.constant 0 : i32
    %c0_i32_0 = arith.constant 0 : i32
    return %c0_i32 : i32
  }
  func.func @transform_4(%arg0: i32, %arg1: i32) -> (i32, i32) {
    %c0_i32 = arith.constant 0 : i32
    %c0_i32_0 = arith.constant 0 : i32
    %c0_i32_1 = arith.constant 0 : i32
    return %c0_i32, %c0_i32_0 : i32, i32
  }
  func.func @transform_5(%arg0: i32, %arg1: i32) -> (i32, i32) {
    %c0_i32 = arith.constant 0 : i32
    %c0_i32_0 = arith.constant 0 : i32
    %c0_i32_1 = arith.constant 0 : i32
    return %c0_i32, %c0_i32_0 : i32, i32
  }
  func.func @transform_6(%arg0: i32, %arg1: i32) -> (i32, i32) {
    %c0_i32 = arith.constant 0 : i32
    %c0_i32_0 = arith.constant 0 : i32
    %c0_i32_1 = arith.constant 0 : i32
    return %c0_i32, %c0_i32_0 : i32, i32
  }
  func.func @transform_7(%arg0: i32, %arg1: i32) -> (i32, i32) {
    %c0_i32 = arith.constant 0 : i32
    %c0_i32_0 = arith.constant 0 : i32
    %c0_i32_1 = arith.constant 0 : i32
    return %c0_i32, %c0_i32_0 : i32, i32
  }
  func.func @transform_8(%arg0: i32, %arg1: i32) -> (i32, i32) {
    %c0_i32 = arith.constant 0 : i32
    %c0_i32_0 = arith.constant 0 : i32
    return %arg0, %c0_i32 : i32, i32
  }
  func.func @transform_9(%arg0: i32, %arg1: i32) -> (i32, i32) {
    %c0_i32 = arith.constant 0 : i32
    %c0_i32_0 = arith.constant 0 : i32
    return %arg0, %c0_i32 : i32, i32
  }
}

module attributes {stable_mosaic.version = 11 : i64} {
  func.func @_dccatt_kernel(%arg0: i32, %arg1: i32, %arg2: memref<2x4x256xf32, #tpu.memory_space<vmem>>, %arg3: memref<2x4xf32, #tpu.memory_space<vmem>>, %arg4: memref<2xf32, #tpu.memory_space<smem>>, %arg5: memref<1xf32, #tpu.memory_space<smem>>, %arg6: memref<1x4xf32, #tpu.memory_space<vmem>>, %arg7: memref<1x4xf32, #tpu.memory_space<vmem>>, %arg8: memref<4x4xf32, #tpu.memory_space<vmem>>, %arg9: memref<1x4xf32, #tpu.memory_space<vmem>>, %arg10: memref<2x4xf32, #tpu.memory_space<vmem>>, %arg11: memref<2x4xf32, #tpu.memory_space<vmem>>, %arg12: memref<2x4xf32, #tpu.memory_space<vmem>>) attributes {dimension_semantics = [#tpu.dimension_semantics<parallel>, #tpu.dimension_semantics<arbitrary>], iteration_bounds = array<i64: 1, 1>, scalar_prefetch = 0 : i64, scratch_operands = 1 : i64, tpu.core_type = #tpu.core_type<tc>, window_params = [{transform_indices = @transform_0, window_bounds = array<i64: 2, 4, 256>}, {transform_indices = @transform_1, window_bounds = array<i64: 2, 4>}, {transform_indices = @transform_2, window_bounds = array<i64: 2>}, {transform_indices = @transform_3, window_bounds = array<i64: 1>}, {pipeline_mode = #tpu.pipeline_mode<synchronous>, transform_indices = @transform_4, window_bounds = array<i64: 1, 4>}, {pipeline_mode = #tpu.pipeline_mode<synchronous>, transform_indices = @transform_5, window_bounds = array<i64: 1, 4>}, {pipeline_mode = #tpu.pipeline_mode<synchronous>, transform_indices = @transform_6, window_bounds = array<i64: 4, 4>}, {pipeline_mode = #tpu.pipeline_mode<synchronous>, transform_indices = @transform_7, window_bounds = array<i64: 1, 4>}, {transform_indices = @transform_8, window_bounds = array<i64: 2, 4>}, {transform_indices = @transform_9, window_bounds = array<i64: 2, 4>}]} {
    %c0 = arith.constant 0 : index
    %c0_0 = arith.constant 0 : index
    %c0_1 = arith.constant 0 : index
    %0 = vector.load %arg2[%c0, %c0_0, %c0_1] : memref<2x4x256xf32, #tpu.memory_space<vmem>>, vector<2x4x256xf32>
    %cst = arith.constant dense<0.000000e+00> : vector<2x4xf32>
    %1 = vector.multi_reduction <add>, %0, %cst [2] : vector<2x4x256xf32> to vector<2x4xf32>
    %c0_i32 = arith.constant 0 : i32
    %2 = arith.cmpi eq, %arg1, %c0_i32 : i32
    %3 = arith.extui %2 : i1 to i32
    %c0_i32_2 = arith.constant 0 : i32
    %4 = arith.cmpi ne, %3, %c0_i32_2 : i32
    scf.if %4 {
      %c0_7 = arith.constant 0 : index
      %c0_8 = arith.constant 0 : index
      %11 = vector.load %arg12[%c0_7, %c0_8] : memref<2x4xf32, #tpu.memory_space<vmem>>, vector<2x4xf32>
      tpu.vector_store %arg12[%c0_7, %c0_8], %1 {strides = array<i32>} : memref<2x4xf32, #tpu.memory_space<vmem>>, vector<2x4xf32>,
    } else {
    }
    %c0_i32_3 = arith.constant 0 : i32
    %5 = arith.cmpi sgt, %arg1, %c0_i32_3 : i32
    %6 = arith.extui %5 : i1 to i32
    %c0_i32_4 = arith.constant 0 : i32
    %7 = arith.cmpi ne, %6, %c0_i32_4 : i32
    scf.if %7 {
      %c0_7 = arith.constant 0 : index
      %c0_8 = arith.constant 0 : index
      %11 = vector.load %arg12[%c0_7, %c0_8] : memref<2x4xf32, #tpu.memory_space<vmem>>, vector<2x4xf32>
      %12 = arith.addf %11, %1 : vector<2x4xf32>
      %c0_9 = arith.constant 0 : index
      %c0_10 = arith.constant 0 : index
      %13 = vector.load %arg12[%c0_9, %c0_10] : memref<2x4xf32, #tpu.memory_space<vmem>>, vector<2x4xf32>
      tpu.vector_store %arg12[%c0_9, %c0_10], %12 {strides = array<i32>} : memref<2x4xf32, #tpu.memory_space<vmem>>, vector<2x4xf32>,
    } else {
    }
    %c0_i32_5 = arith.constant 0 : i32
    %8 = arith.cmpi eq, %arg1, %c0_i32_5 : i32
    %9 = arith.extui %8 : i1 to i32
    %c0_i32_6 = arith.constant 0 : i32
    %10 = arith.cmpi ne, %9, %c0_i32_6 : i32
    scf.if %10 {
      %c0_7 = arith.constant 0 : index
      %c0_8 = arith.constant 0 : index
      %11 = vector.load %arg12[%c0_7, %c0_8] : memref<2x4xf32, #tpu.memory_space<vmem>>, vector<2x4xf32>
      %cst_9 = arith.constant 3.906250e-03 : f32
      %12 = vector.broadcast %cst_9 : f32 to vector<2x4xf32>
      %13 = arith.mulf %11, %12 : vector<2x4xf32>
      %c0_10 = arith.constant 0 : index
      %c0_11 = arith.constant 0 : index
      %14 = vector.load %arg3[%c0_10, %c0_11] : memref<2x4xf32, #tpu.memory_space<vmem>>, vector<2x4xf32>
      %c0_12 = arith.constant 0 : index
      %15 = memref.load %arg4[%c0_12] : memref<2xf32, #tpu.memory_space<smem>>
      %16 = vector.broadcast %15 : f32 to vector<2x4xf32>
      %17 = arith.mulf %16, %13 : vector<2x4xf32>
      %c1 = arith.constant 1 : index
      %18 = memref.load %arg4[%c1] : memref<2xf32, #tpu.memory_space<smem>>
      %19 = vector.broadcast %18 : f32 to vector<2x4xf32>
      %20 = arith.mulf %19, %14 : vector<2x4xf32>
      %21 = arith.addf %17, %20 : vector<2x4xf32>
      %c0_13 = arith.constant 0 : index
      %22 = memref.load %arg5[%c0_13] : memref<1xf32, #tpu.memory_space<smem>>
      %23 = vector.broadcast %22 : f32 to vector<2x4xf32>
      %24 = arith.addf %21, %23 : vector<2x4xf32>
      %cst_14 = arith.constant dense<0.000000e+00> : vector<2xf32>
      %25 = vector.multi_reduction <add>, %24, %cst_14 [1] : vector<2x4xf32> to vector<2xf32>
      %26 = vector.shape_cast %25 : vector<2xf32> to vector<2x1xf32>
      %cst_15 = arith.constant 4.000000e+00 : f32
      %27 = vector.broadcast %cst_15 : f32 to vector<2x1xf32>
      %28 = arith.divf %26, %27 : vector<2x1xf32>
      %29 = vector.broadcast %28 : vector<2x1xf32> to vector<2x4xf32>
      %30 = arith.subf %24, %29 : vector<2x4xf32>
      %31 = vector.broadcast %28 : vector<2x1xf32> to vector<2x4xf32>
      %32 = arith.subf %24, %31 : vector<2x4xf32>
      %33 = arith.mulf %30, %32 : vector<2x4xf32>
      %cst_16 = arith.constant dense<0.000000e+00> : vector<2xf32>
      %34 = vector.multi_reduction <add>, %33, %cst_16 [1] : vector<2x4xf32> to vector<2xf32>
      %35 = vector.shape_cast %34 : vector<2xf32> to vector<2x1xf32>
      %cst_17 = arith.constant 4.000000e+00 : f32
      %36 = vector.broadcast %cst_17 : f32 to vector<2x1xf32>
      %37 = arith.divf %35, %36 : vector<2x1xf32>
      %38 = vector.broadcast %28 : vector<2x1xf32> to vector<2x4xf32>
      %39 = arith.subf %24, %38 : vector<2x4xf32>
      %cst_18 = arith.constant 9.99999974E-6 : f32
      %40 = vector.broadcast %cst_18 : f32 to vector<2x1xf32>
      %41 = arith.addf %37, %40 : vector<2x1xf32>
      %42 = math.rsqrt %41 : vector<2x1xf32>
      %43 = vector.broadcast %42 : vector<2x1xf32> to vector<2x4xf32>
      %44 = arith.mulf %39, %43 : vector<2x4xf32>
      %c0_19 = arith.constant 0 : index
      %c0_20 = arith.constant 0 : index
      %45 = vector.load %arg6[%c0_19, %c0_20] : memref<1x4xf32, #tpu.memory_space<vmem>>, vector<1x4xf32>
      %46 = vector.broadcast %45 : vector<1x4xf32> to vector<2x4xf32>
      %47 = arith.mulf %44, %46 : vector<2x4xf32>
      %c0_21 = arith.constant 0 : index
      %c0_22 = arith.constant 0 : index
      %48 = vector.load %arg7[%c0_21, %c0_22] : memref<1x4xf32, #tpu.memory_space<vmem>>, vector<1x4xf32>
      %49 = vector.broadcast %48 : vector<1x4xf32> to vector<2x4xf32>
      %50 = arith.addf %47, %49 : vector<2x4xf32>
      %cst_23 = arith.constant 0.000000e+00 : f32
      %51 = vector.broadcast %cst_23 : f32 to vector<2x4xf32>
      %52 = arith.maximumf %50, %51 : vector<2x4xf32>
      %c0_24 = arith.constant 0 : index
      %c0_25 = arith.constant 0 : index
      %53 = vector.load %arg8[%c0_24, %c0_25] : memref<4x4xf32, #tpu.memory_space<vmem>>, vector<4x4xf32>
      %cst_26 = arith.constant dense<0.000000e+00> : vector<2x4xf32>
      %54 = tpu.matmul %52, %53, %cst_26 {dimension_numbers = #tpu.dot_dimension_numbers<[1], [0], [0], [1], [0, 0, 1, 1], [], []>} : vector<2x4xf32>, vector<4x4xf32>, vector<2x4xf32> -> vector<2x4xf32>
      %c0_27 = arith.constant 0 : index
      %c0_28 = arith.constant 0 : index
      %55 = vector.load %arg9[%c0_27, %c0_28] : memref<1x4xf32, #tpu.memory_space<vmem>>, vector<1x4xf32>
      %56 = vector.broadcast %55 : vector<1x4xf32> to vector<2x4xf32>
      %57 = arith.addf %54, %56 : vector<2x4xf32>
      %58 = arith.negf %57 : vector<2x4xf32>
      %59 = math.exp %58 : vector<2x4xf32>
      %cst_29 = arith.constant 1.000000e+00 : f32
      %60 = vector.broadcast %cst_29 : f32 to vector<2x4xf32>
      %61 = arith.addf %60, %59 : vector<2x4xf32>
      %62 = arith.divf %60, %61 : vector<2x4xf32>
      %c0_30 = arith.constant 0 : index
      %c0_31 = arith.constant 0 : index
      %63 = vector.load %arg10[%c0_30, %c0_31] : memref<2x4xf32, #tpu.memory_space<vmem>>, vector<2x4xf32>
      tpu.vector_store %arg10[%c0_30, %c0_31], %62 {strides = array<i32>} : memref<2x4xf32, #tpu.memory_space<vmem>>, vector<2x4xf32>,
      %64 = arith.mulf %13, %62 : vector<2x4xf32>
      %c0_32 = arith.constant 0 : index
      %c0_33 = arith.constant 0 : index
      %65 = vector.load %arg11[%c0_32, %c0_33] : memref<2x4xf32, #tpu.memory_space<vmem>>, vector<2x4xf32>
      tpu.vector_store %arg11[%c0_32, %c0_33], %64 {strides = array<i32>} : memref<2x4xf32, #tpu.memory_space<vmem>>, vector<2x4xf32>,
    } else {
    }
    return
  }
  func.func @transform_0(%arg0: i32, %arg1: i32) -> (i32, i32, i32) {
    %c0_i32 = arith.constant 0 : i32
    %c0_i32_0 = arith.constant 0 : i32
    return %arg0, %c0_i32, %arg1 : i32, i32, i32
  }
  func.func @transform_1(%arg0: i32, %arg1: i32) -> (i32, i32) {
    %c0_i32 = arith.constant 0 : i32
    %c0_i32_0 = arith.constant 0 : i32
    return %arg0, %c0_i32 : i32, i32
  }
  func.func @transform_2(%arg0: i32, %arg1: i32) -> i32 {
    %c0_i32 = arith.constant 0 : i32
    %c0_i32_0 = arith.constant 0 : i32
    return %c0_i32 : i32
  }
  func.func @transform_3(%arg0: i32, %arg1: i32) -> i32 {
    %c0_i32 = arith.constant 0 : i32
    %c0_i32_0 = arith.constant 0 : i32
    return %c0_i32 : i32
  }
  func.func @transform_4(%arg0: i32, %arg1: i32) -> (i32, i32) {
    %c0_i32 = arith.constant 0 : i32
    %c0_i32_0 = arith.constant 0 : i32
    %c0_i32_1 = arith.constant 0 : i32
    return %c0_i32, %c0_i32_0 : i32, i32
  }
  func.func @transform_5(%arg0: i32, %arg1: i32) -> (i32, i32) {
    %c0_i32 = arith.constant 0 : i32
    %c0_i32_0 = arith.constant 0 : i32
    %c0_i32_1 = arith.constant 0 : i32
    return %c0_i32, %c0_i32_0 : i32, i32
  }
  func.func @transform_6(%arg0: i32, %arg1: i32) -> (i32, i32) {
    %c0_i32 = arith.constant 0 : i32
    %c0_i32_0 = arith.constant 0 : i32
    %c0_i32_1 = arith.constant 0 : i32
    return %c0_i32, %c0_i32_0 : i32, i32
  }
  func.func @transform_7(%arg0: i32, %arg1: i32) -> (i32, i32) {
    %c0_i32 = arith.constant 0 : i32
    %c0_i32_0 = arith.constant 0 : i32
    %c0_i32_1 = arith.constant 0 : i32
    return %c0_i32, %c0_i32_0 : i32, i32
  }
  func.func @transform_8(%arg0: i32, %arg1: i32) -> (i32, i32) {
    %c0_i32 = arith.constant 0 : i32
    %c0_i32_0 = arith.constant 0 : i32
    return %arg0, %c0_i32 : i32, i32
  }
  func.func @transform_9(%arg0: i32, %arg1: i32) -> (i32, i32) {
    %c0_i32 = arith.constant 0 : i32
    %c0_i32_0 = arith.constant 0 : i32
    return %arg0, %c0_i32 : i32, i32
  }
}

</mosaic_0001>

<llo_original>
// kernel: tpu_custom_call.1
$region0: #{tpu_custom_call.1}
  #allocation0 [shape = 'u32[]', space=smem, size = 0x4, offset = 0x4, fixed_abs, tag = 'smem constant byte address 0x4 - core index']
  #allocation1 [shape = 'u32[144,128]{1,0:T(1,128)}', space=vmem, size = 0x12000, scoped, tag = 'internal scratch']
  #allocation2 [shape = 'f32[2,4]{1,0:T(2,128)}', space=vmem, size = 0x400, scoped, tag = 'scratch operand']
  #allocation3 [shape = 'f32[1]{0:T(128)S(6)}', space=smem, size = 0x200, scoped, tag = 'scoped memory for tpu_custom_call.1']
  %s0 = inlined_call_operand.hbm [shape: f32[2,4,256], index: 0, kind: input, shape index: {}]
  %s1 = inlined_call_operand.vmem [shape: f32[2,4], index: 1, kind: input, shape index: {}]
  %s2 = inlined_call_operand.vmem [shape: f32[2], index: 2, kind: input, shape index: {}]
  %s3 = inlined_call_operand.<no memory space> [shape: f32[1], index: 3, kind: input, shape index: {}]
  %s4 = inlined_call_operand.hbm [shape: f32[1,4], index: 4, kind: input, shape index: {}]
  %s5 = inlined_call_operand.vmem [shape: f32[1,4], index: 5, kind: input, shape index: {}]
  %s6 = inlined_call_operand.vmem [shape: f32[4,4], index: 6, kind: input, shape index: {}]
  %s7 = inlined_call_operand.vmem [shape: f32[1,4], index: 7, kind: input, shape index: {}]
  %s8 = inlined_call_operand.hbm [shape: f32[2,4], index: 8, kind: output, shape index: {0}]
  %s9 = inlined_call_operand.hbm [shape: f32[2,4], index: 9, kind: output, shape index: {1}]
  %10 = xla_tuple %s8, %s9
  %s11 = sld [smem:[#allocation0]]
  $region74: #{tpu_custom_call.1} parent=0
    _
  %s13 = ssub.s32 1, %s11
  %s14 = scalar_select 0, %s13, %s11
  %15 = sst [smem:[#allocation3]] %s3
  $region1: #{tpu_custom_call.1} parent=0
    #allocation4 [shape = 'u8[8192]{0}', space=vmem, size = 0x2000, scoped, tag = 'input window, operand 0, single buffered']
    #allocation5 [shape = 's32[1]{0}', space=sflag, size = 0x4, scoped, tag = 'scoped memory for tpu_custom_call.1']
    #allocation6 [shape = 's32[1]{0}', space=sflag, size = 0x4, scoped, tag = 'scoped memory for tpu_custom_call.1']
    #allocation7 [shape = 's32[1]{0}', space=sflag, size = 0x4, scoped, tag = 'scoped memory for tpu_custom_call.1']
    #allocation8 [shape = 'u8[512]{0}', space=smem, size = 0x200, scoped, tag = 'input window, operand 2, single buffered']
    #allocation9 [shape = 'u8[512]{0}', space=vmem, size = 0x400, scoped, tag = 'input window, operand 4, single buffered']
    #allocation10 [shape = 's32[1]{0}', space=sflag, size = 0x4, scoped, tag = 'scoped memory for tpu_custom_call.1']
    #allocation11 [shape = 'u8[1024]{0}', space=vmem, size = 0x400, scoped, tag = 'output window, operand 0, single buffered']
    #allocation12 [shape = 'u8[1024]{0}', space=vmem, size = 0x400, scoped, tag = 'output window, operand 1, single buffered']
    #allocation13 [shape = 's32[1]{0}', space=sflag, size = 0x4, scoped, tag = 'scoped memory for tpu_custom_call.1']
    %16 = vsyncpa [#allocation5], 0
    %17 = vsyncpa [#allocation7], 0
    %18 = vsyncpa [#allocation10], 0
    %19 = vsyncpa [#allocation6], 0
    %20 = vsyncpa [#allocation13], 0
    // Predicated region
    $region2: #{tpu_custom_call.1} parent=1 // pred_check
      _
    $region3: #{tpu_custom_call.1} parent=1 // pred_check_branch
      %22 = sbr.rel (0) target = $region5
    $region4: #{tpu_custom_call.1} parent=1 // pred_region
      %s24 = ssub.s32 256, 256
      %25 = vsyncadd [#allocation5], %s24
      %s26 = sshll.u32 [#allocation4], 4
      %s27 = int_to_ptr.vmem [resolvable:$true] %s26
      %32 = dma.hbm_to_vmem [thread:$0]  %s0, 256, %s27, [#allocation5], 128, 128, 8
    $region5: #{tpu_custom_call.1} parent=1 // pred_fallthru
      _
    // Predicated region
    $region6: #{tpu_custom_call.1} parent=1 // pred_check
      _
    $region7: #{tpu_custom_call.1} parent=1 // pred_check_branch
      %34 = sbr.rel (0) target = $region9
    $region8: #{tpu_custom_call.1} parent=1 // pred_region
      _
    $region9: #{tpu_custom_call.1} parent=1 // pred_fallthru
      _
    // Predicated region
    $region10: #{tpu_custom_call.1} parent=1 // pred_check
      _
    $region11: #{tpu_custom_call.1} parent=1 // pred_check_branch
      %36 = sbr.rel (0) target = $region13
    $region12: #{tpu_custom_call.1} parent=1 // pred_region
      %s38 = ssub.s32 16, 16
      %39 = vsyncadd [#allocation7], %s38
      %s41 = sshll.u32 %s2, 4
      %s42 = int_to_ptr.vmem [resolvable:$true] %s41
      %44 = dma.vmem_to_smem %s42, 16, [#allocation8], [#allocation7]
    $region13: #{tpu_custom_call.1} parent=1 // pred_fallthru
      _
    // Predicated region
    $region14: #{tpu_custom_call.1} parent=1 // pred_check
      _
    $region15: #{tpu_custom_call.1} parent=1 // pred_check_branch
      %46 = sbr.rel (0) target = $region17
    $region16: #{tpu_custom_call.1} parent=1 // pred_region
      _
    $region17: #{tpu_custom_call.1} parent=1 // pred_fallthru
      _
    // Predicated region
    $region18: #{tpu_custom_call.1} parent=1 // pred_check
      _
    $region19: #{tpu_custom_call.1} parent=1 // pred_check_branch
      %48 = sbr.rel (0) target = $region21
    $region20: #{tpu_custom_call.1} parent=1 // pred_region
      %s50 = ssub.s32 16, 16
      %51 = vsyncadd [#allocation10], %s50
      %s53 = sshll.u32 [#allocation9], 4
      %s54 = int_to_ptr.vmem [resolvable:$true] %s53
      %56 = dma.hbm_to_vmem [thread:$0]  %s4, 16, %s54, [#allocation10]
    $region21: #{tpu_custom_call.1} parent=1 // pred_fallthru
      _
    // Predicated region
    $region22: #{tpu_custom_call.1} parent=1 // pred_check
      _
    $region23: #{tpu_custom_call.1} parent=1 // pred_check_branch
      %58 = sbr.rel (0) target = $region25
    $region24: #{tpu_custom_call.1} parent=1 // pred_region
      _
    $region25: #{tpu_custom_call.1} parent=1 // pred_fallthru
      _
    // Predicated region
    $region26: #{tpu_custom_call.1} parent=1 // pred_check
      _
    $region27: #{tpu_custom_call.1} parent=1 // pred_check_branch
      %60 = sbr.rel (0) target = $region29
    $region28: #{tpu_custom_call.1} parent=1 // pred_region
      _
    $region29: #{tpu_custom_call.1} parent=1 // pred_fallthru
      _
    // Predicated region
    $region30: #{tpu_custom_call.1} parent=1 // pred_check
      _
    $region31: #{tpu_custom_call.1} parent=1 // pred_check_branch
      %62 = sbr.rel (0) target = $region33
    $region32: #{tpu_custom_call.1} parent=1 // pred_region
      _
    $region33: #{tpu_custom_call.1} parent=1 // pred_fallthru
      _
    // Predicated region
    $region34: #{tpu_custom_call.1} parent=1 // pred_check
      _
    $region35: #{tpu_custom_call.1} parent=1 // pred_check_branch
      %64 = sbr.rel (0) target = $region37
    $region36: #{tpu_custom_call.1} parent=1 // pred_region
      %65 = dma.done [#allocation5], 256
    $region37: #{tpu_custom_call.1} parent=1 // pred_fallthru
      _
    // Predicated region
    $region38: #{tpu_custom_call.1} parent=1 // pred_check
      _
    $region39: #{tpu_custom_call.1} parent=1 // pred_check_branch
      %67 = sbr.rel (0) target = $region41
    $region40: #{tpu_custom_call.1} parent=1 // pred_region
      %68 = dma.done [#allocation7], 16
    $region41: #{tpu_custom_call.1} parent=1 // pred_fallthru
      _
    // Predicated region
    $region42: #{tpu_custom_call.1} parent=1 // pred_check
      _
    $region43: #{tpu_custom_call.1} parent=1 // pred_check_branch
      %70 = sbr.rel (0) target = $region45
    $region44: #{tpu_custom_call.1} parent=1 // pred_region
      %71 = dma.done [#allocation10], 16
    $region45: #{tpu_custom_call.1} parent=1 // pred_fallthru
      _
    %72 = sfence
    %v73 = vld [vmem:[#allocation4] sm:$0xff]
    %v74 = vld [vmem:[#allocation4 + $0x8] sm:$0xff]
    %v77 = vcombine.high %v73, %v73
    %v78 = vcombine.high %v74, %v74
    %vm81 = vcmask 1043456
    %v82 = vsel %vm81, %v73, 0.0
    %v83 = vsel %vm81, %v77, 0.0
    %v84 = vadd.f32 %v82, %v83
    %85 = vadd.xlane.f32.xlu0 %v84
    %v86 = vpop.xlane.xlu0 %85
    %v87 = vsel %vm81, %v74, 0.0
    %v88 = vsel %vm81, %v78, 0.0
    %v89 = vadd.f32 %v87, %v88
    %90 = vadd.xlane.f32.xlu0 %v89
    %v91 = vpop.xlane.xlu0 %90
    %p92 = scmp.eq.s32.totalorder 0, 0
    // Predicated region
    $region46: #{tpu_custom_call.1} parent=1 // pred_check
      %p93 = pneg %p92
    $region47: #{tpu_custom_call.1} parent=1 // pred_check_branch
      %95 = sbr.rel (%p93) target = $region49
    $region48: #{tpu_custom_call.1} parent=1 // pred_region
      %v98 = vlaneseq
      %v99 = vand.u32 %v98, 127
      %v100 = vlaneseq
      %v101 = vshrl.u32 %v100, 7
      %v102 = vsub.s32 %v99, %v101
      %v103 = vrot.slane %v86, %v102
      %v104 = vlaneseq
      %v105 = vshrl.u32 %v104, 7
      %v106 = vsub.s32 %v99, %v105
      %v107 = vrot.slane %v91, %v106
      %vm108 = vcmask 1041409
      %v109 = vsel %vm108, %v107, %v103
      %vm111 = vcmask 25600
      %112 = vst.msk [vmem:[#allocation2] sm:$0x3] %vm111, %v109
    $region49: #{tpu_custom_call.1} parent=1 // pred_fallthru
      _
    %p113 = scmp.gt.s32.totalorder 0, 0
    // Predicated region
    $region50: #{tpu_custom_call.1} parent=1 // pred_check
      %p114 = pneg %p113
    $region51: #{tpu_custom_call.1} parent=1 // pred_check_branch
      %116 = sbr.rel (%p114) target = $region53
    $region52: #{tpu_custom_call.1} parent=1 // pred_region
      %v117 = vld [vmem:[#allocation2] sm:$0x3]
      %v120 = vlaneseq
      %v121 = vand.u32 %v120, 127
      %v122 = vlaneseq
      %v123 = vshrl.u32 %v122, 7
      %v124 = vsub.s32 %v121, %v123
      %v125 = vrot.slane %v86, %v124
      %v126 = vlaneseq
      %v127 = vshrl.u32 %v126, 7
      %v128 = vsub.s32 %v121, %v127
      %v129 = vrot.slane %v91, %v128
      %vm130 = vcmask 1041409
      %v131 = vsel %vm130, %v129, %v125
      %v133 = vadd.f32 %v117, %v131
      %vm134 = vcmask 25600
      %135 = vst.msk [vmem:[#allocation2] sm:$0x3] %vm134, %v133
    $region53: #{tpu_custom_call.1} parent=1 // pred_fallthru
      _
    // Predicated region
    $region54: #{tpu_custom_call.1} parent=1 // pred_check
      %p136 = pneg %p92
    $region55: #{tpu_custom_call.1} parent=1 // pred_check_branch
      %138 = sbr.rel (%p136) target = $region57
    $region56: #{tpu_custom_call.1} parent=1 // pred_region
      %v139 = vld [vmem:[#allocation2] sm:$0x3]
      %v140 = vmul.f32 %v139, 0.00390625
      %v141 = vld [vmem:[%s1] sm:$0x3]
      %s142 = sld [smem:[#allocation8]]
      %v143 = vstv %s142
      %v144 = vmul.f32 %v143, %v140
      %s145 = sld [smem:[#allocation8 + $0x1]]
      %v146 = vstv %s145
      %v147 = vmul.f32 %v146, %v141
      %v148 = vadd.f32 %v144, %v147
      %s149 = sld [smem:[#allocation3]]
      %v150 = vstv %s149
      %v151 = vadd.f32 %v148, %v150
      %vm152 = vcmask 25600
      %v153 = vsel %vm152, %v151, 0.0
      %154 = vadd.xlane.f32.xlu0 %v153
      %v155 = vpop.xlane.xlu0 %154
      %v156 = vrcp.pop 4.0
      %v157 = vmul.f32 %v155, %v156
      %v158 = vsub.f32 %v151, %v157
      %v159 = vmul.f32 %v158, %v158
      %v160 = vsel %vm152, %v159, 0.0
      %161 = vadd.xlane.f32.xlu0 %v160
      %v162 = vpop.xlane.xlu0 %161
      %v163 = vmul.f32 %v162, %v156
      %v164 = vadd.f32 %v163, 1e-05
      %v165 = vrsqrt.pop %v164
      %v166 = vmul.f32 %v158, %v165
      %v167 = vld [vmem:[#allocation9] sm:$0x1]
      %v169 = vlaneseq
      %v170 = vshrl.u32 %v169, 7
      %v171 = vsub.s32 0, %v170
      %v172 = vrot.slane %v167, %v171
      %v174 = vmul.f32 %v166, %v172
      %v175 = vld [vmem:[%s5] sm:$0x1]
      %v177 = vlaneseq
      %v178 = vshrl.u32 %v177, 7
      %v179 = vsub.s32 0, %v178
      %v180 = vrot.slane %v175, %v179
      %v182 = vadd.f32 %v174, %v180
      %v183 = vmax.f32 %v182, 0.0
      %v184 = vld [vmem:[%s6] sm:$0xf]
      %v185 = vld [vmem:[%s7] sm:$0x1]
      %v187 = vlaneseq
      %v188 = vshrl.u32 %v187, 7
      %v189 = vsub.s32 0, %v188
      %v190 = vrot.slane %v185, %v189
      %vm192 = vcmask 31744
      %v194 = vsel %vm192, %v183, 0
      %v197 = vsel %vm81, %v184, 0
      %199 = vmatprep.subr.mxu0 0.0
      %200 = vmatpush1.msra.mxu0 0.0
      %201 = vmatprep.subr.mxu0 0.0
      %202 = vmatpush1.msra.mxu0 0.0
      %203 = vmatprep.subr.mxu0 0.0
      %204 = vmatpush1.msra.mxu0 0.0
      %205 = vmatprep.subr.mxu0 0.0
      %206 = vmatpush1.msra.mxu0 0.0
      %207 = vmatprep.subr.mxu0 0.0
      %208 = vmatpush1.msra.mxu0 0.0
      %209 = vmatprep.subr.mxu0 0.0
      %210 = vmatpush1.msra.mxu0 0.0
      %211 = vmatprep.subr.mxu0 0.0
      %212 = vmatpush1.msra.mxu0 0.0
      %213 = vmatprep.subr.mxu0 0.0
      %214 = vmatpush1.msra.mxu0 0.0
      %215 = vmatprep.subr.mxu0 0.0
      %216 = vmatpush1.msra.mxu0 0.0
      %217 = vmatprep.subr.mxu0 0.0
      %218 = vmatpush1.msra.mxu0 0.0
      %219 = vmatprep.subr.mxu0 0.0
      %220 = vmatpush1.msra.mxu0 0.0
      %221 = vmatprep.subr.mxu0 0.0
      %222 = vmatpush1.msra.mxu0 0.0
      %223 = vmatprep.subr.mxu0 0.0
      %224 = vmatpush1.msra.mxu0 0.0
      %225 = vmatprep.subr.mxu0 0.0
      %226 = vmatpush1.msra.mxu0 0.0
      %227 = vmatprep.subr.mxu0 0.0
      %228 = vmatpush1.msra.mxu0 0.0
      %229 = vmatprep.subr.mxu0 0.0
      %230 = vmatpush1.msra.mxu0 %v197
      %231 = vmatprep.subr.mxu0 0.0
      %232 = vmatpush2.msra.mxu0 0.0
      %233 = vmatprep.subr.mxu0 0.0
      %234 = vmatpush2.msra.mxu0 0.0
      %235 = vmatprep.subr.mxu0 0.0
      %236 = vmatpush2.msra.mxu0 0.0
      %237 = vmatprep.subr.mxu0 0.0
      %238 = vmatpush2.msra.mxu0 0.0
      %239 = vmatprep.subr.mxu0 0.0
      %240 = vmatpush2.msra.mxu0 0.0
      %241 = vmatprep.subr.mxu0 0.0
      %242 = vmatpush2.msra.mxu0 0.0
      %243 = vmatprep.subr.mxu0 0.0
      %244 = vmatpush2.msra.mxu0 0.0
      %245 = vmatprep.subr.mxu0 0.0
      %246 = vmatpush2.msra.mxu0 0.0
      %247 = vmatprep.subr.mxu0 0.0
      %248 = vmatpush2.msra.mxu0 0.0
      %249 = vmatprep.subr.mxu0 0.0
      %250 = vmatpush2.msra.mxu0 0.0
      %251 = vmatprep.subr.mxu0 0.0
      %252 = vmatpush2.msra.mxu0 0.0
      %253 = vmatprep.subr.mxu0 0.0
      %254 = vmatpush2.msra.mxu0 0.0
      %255 = vmatprep.subr.mxu0 0.0
      %256 = vmatpush2.msra.mxu0 0.0
      %257 = vmatprep.subr.mxu0 0.0
      %258 = vmatpush2.msra.mxu0 0.0
      %259 = vmatprep.subr.mxu0 0.0
      %260 = vmatpush2.msra.mxu0 0.0
      %261 = vmatprep.subr.mxu0 0.0
      %262 = vmatpush2.msra.mxu0 0.0
      %263 = vmatprep.mubr.f32.mxu0 0.0
      %264 = vmatmul.mubr.f32.gmra.mxu0 %v194
      %v265 = vpop.f32.mrf.mxu0
      %v266 = vadd.f32 %v190, %v265
      %v267 = vpop.f32.mrf.mxu0
      %268 = vdwg.mxu0
      %v269 = vxor.u32 %v266, 2147483648
      %v270 = vmul.f32 %v269, 1.442695
      %v271 = vpow.pop %v270
      %v272 = vadd.f32 %v271, 1.0
      %v273 = vrcp.pop %v272
      %v274 = vmul.f32 1.0, %v273
      %275 = vst.msk [vmem:[#allocation11] sm:$0x3] %vm152, %v274
      %v276 = vmul.f32 %v140, %v274
      %277 = vst.msk [vmem:[#allocation12] sm:$0x3] %vm152, %v276
    $region57: #{tpu_custom_call.1} parent=1 // pred_fallthru
      _
    // Predicated region
    $region58: #{tpu_custom_call.1} parent=1 // pred_check
      _
    $region59: #{tpu_custom_call.1} parent=1 // pred_check_branch
      %279 = sbr.rel (0) target = $region61
    $region60: #{tpu_custom_call.1} parent=1 // pred_region
      %s281 = ssub.s32 32, 32
      %282 = vsyncadd [#allocation6], %s281
      %s284 = sshll.u32 [#allocation11], 4
      %s285 = int_to_ptr.vmem [resolvable:$true] %s284
      %287 = dma.vmem_to_hbm [thread:$0]  %s285, 32, %s8, [#allocation6]
    $region61: #{tpu_custom_call.1} parent=1 // pred_fallthru
      _
    // Predicated region
    $region62: #{tpu_custom_call.1} parent=1 // pred_check
      _
    $region63: #{tpu_custom_call.1} parent=1 // pred_check_branch
      %289 = sbr.rel (0) target = $region65
    $region64: #{tpu_custom_call.1} parent=1 // pred_region
      %s291 = ssub.s32 32, 32
      %292 = vsyncadd [#allocation13], %s291
      %s294 = sshll.u32 [#allocation12], 4
      %s295 = int_to_ptr.vmem [resolvable:$true] %s294
      %297 = dma.vmem_to_hbm [thread:$0]  %s295, 32, %s9, [#allocation13]
    $region65: #{tpu_custom_call.1} parent=1 // pred_fallthru
      _
    // Predicated region
    $region66: #{tpu_custom_call.1} parent=1 // pred_check
      _
    $region67: #{tpu_custom_call.1} parent=1 // pred_check_branch
      %299 = sbr.rel (0) target = $region69
    $region68: #{tpu_custom_call.1} parent=1 // pred_region
      %300 = dma.done [#allocation6], 32
    $region69: #{tpu_custom_call.1} parent=1 // pred_fallthru
      _
    // Predicated region
    $region70: #{tpu_custom_call.1} parent=1 // pred_check
      _
    $region71: #{tpu_custom_call.1} parent=1 // pred_check_branch
      %302 = sbr.rel (0) target = $region73
    $region72: #{tpu_custom_call.1} parent=1 // pred_region
      %303 = dma.done [#allocation13], 32
    $region73: #{tpu_custom_call.1} parent=1 // pred_fallthru
      _
    %304 = vsyncpa [#allocation5], 1
    %305 = vsyncpa [#allocation10], 1
    %306 = vsyncpa [#allocation6], 1
    %307 = vsyncpa [#allocation13], 1
    %308 = vsyncpa [#allocation7], 1

// kernel: tpu_custom_call.1
$region0: #{tpu_custom_call.1}
  #allocation0 [shape = 'u32[]', space=smem, size = 0x4, offset = 0x4, fixed_abs, tag = 'smem constant byte address 0x4 - core index']
  #allocation1 [shape = 'u32[144,128]{1,0:T(1,128)}', space=vmem, size = 0x12000, scoped, tag = 'internal scratch']
  #allocation2 [shape = 'f32[2,4]{1,0:T(2,128)}', space=vmem, size = 0x400, scoped, tag = 'scratch operand']
  #allocation3 [shape = 'f32[1]{0:T(128)S(6)}', space=smem, size = 0x200, scoped, tag = 'scoped memory for tpu_custom_call.1']
  %s0 = inlined_call_operand.hbm [shape: f32[2,4,256], index: 0, kind: input, shape index: {}]
  %s1 = inlined_call_operand.vmem [shape: f32[2,4], index: 1, kind: input, shape index: {}]
  %s2 = inlined_call_operand.vmem [shape: f32[2], index: 2, kind: input, shape index: {}]
  %s3 = inlined_call_operand.<no memory space> [shape: f32[1], index: 3, kind: input, shape index: {}]
  %s4 = inlined_call_operand.hbm [shape: f32[1,4], index: 4, kind: input, shape index: {}]
  %s5 = inlined_call_operand.vmem [shape: f32[1,4], index: 5, kind: input, shape index: {}]
  %s6 = inlined_call_operand.vmem [shape: f32[4,4], index: 6, kind: input, shape index: {}]
  %s7 = inlined_call_operand.vmem [shape: f32[1,4], index: 7, kind: input, shape index: {}]
  %s8 = inlined_call_operand.hbm [shape: f32[2,4], index: 8, kind: output, shape index: {0}]
  %s9 = inlined_call_operand.hbm [shape: f32[2,4], index: 9, kind: output, shape index: {1}]
  %10 = xla_tuple %s8, %s9
  %s11 = sld [smem:[#allocation0]]
  $region74: #{tpu_custom_call.1} parent=0
    _
  %s13 = ssub.s32 1, %s11
  %s14 = scalar_select 0, %s13, %s11
  %15 = sst [smem:[#allocation3]] %s3
  $region1: #{tpu_custom_call.1} parent=0
    #allocation4 [shape = 'u8[8192]{0}', space=vmem, size = 0x2000, scoped, tag = 'input window, operand 0, single buffered']
    #allocation5 [shape = 's32[1]{0}', space=sflag, size = 0x4, scoped, tag = 'scoped memory for tpu_custom_call.1']
    #allocation6 [shape = 's32[1]{0}', space=sflag, size = 0x4, scoped, tag = 'scoped memory for tpu_custom_call.1']
    #allocation7 [shape = 's32[1]{0}', space=sflag, size = 0x4, scoped, tag = 'scoped memory for tpu_custom_call.1']
    #allocation8 [shape = 'u8[512]{0}', space=smem, size = 0x200, scoped, tag = 'input window, operand 2, single buffered']
    #allocation9 [shape = 'u8[512]{0}', space=vmem, size = 0x400, scoped, tag = 'input window, operand 4, single buffered']
    #allocation10 [shape = 's32[1]{0}', space=sflag, size = 0x4, scoped, tag = 'scoped memory for tpu_custom_call.1']
    #allocation11 [shape = 'u8[1024]{0}', space=vmem, size = 0x400, scoped, tag = 'output window, operand 0, single buffered']
    #allocation12 [shape = 'u8[1024]{0}', space=vmem, size = 0x400, scoped, tag = 'output window, operand 1, single buffered']
    #allocation13 [shape = 's32[1]{0}', space=sflag, size = 0x4, scoped, tag = 'scoped memory for tpu_custom_call.1']
    %16 = vsyncpa [#allocation5], 0
    %17 = vsyncpa [#allocation7], 0
    %18 = vsyncpa [#allocation10], 0
    %19 = vsyncpa [#allocation6], 0
    %20 = vsyncpa [#allocation13], 0
    // Predicated region
    $region2: #{tpu_custom_call.1} parent=1 // pred_check
      _
    $region3: #{tpu_custom_call.1} parent=1 // pred_check_branch
      %22 = sbr.rel (0) target = $region5
    $region4: #{tpu_custom_call.1} parent=1 // pred_region
      %s24 = ssub.s32 256, 256
      %25 = vsyncadd [#allocation5], %s24
      %s26 = sshll.u32 [#allocation4], 4
      %s27 = int_to_ptr.vmem [resolvable:$true] %s26
      %32 = dma.hbm_to_vmem [thread:$0]  %s0, 256, %s27, [#allocation5], 128, 128, 8
    $region5: #{tpu_custom_call.1} parent=1 // pred_fallthru
      _
    // Predicated region
    $region6: #{tpu_custom_call.1} parent=1 // pred_check
      _
    $region7: #{tpu_custom_call.1} parent=1 // pred_check_branch
      %34 = sbr.rel (0) target = $region9
    $region8: #{tpu_custom_call.1} parent=1 // pred_region
      _
    $region9: #{tpu_custom_call.1} parent=1 // pred_fallthru
      _
    // Predicated region
    $region10: #{tpu_custom_call.1} parent=1 // pred_check
      _
    $region11: #{tpu_custom_call.1} parent=1 // pred_check_branch
      %36 = sbr.rel (0) target = $region13
    $region12: #{tpu_custom_call.1} parent=1 // pred_region
      %s38 = ssub.s32 16, 16
      %39 = vsyncadd [#allocation7], %s38
      %s41 = sshll.u32 %s2, 4
      %s42 = int_to_ptr.vmem [resolvable:$true] %s41
      %44 = dma.vmem_to_smem %s42, 16, [#allocation8], [#allocation7]
    $region13: #{tpu_custom_call.1} parent=1 // pred_fallthru
      _
    // Predicated region
    $region14: #{tpu_custom_call.1} parent=1 // pred_check
      _
    $region15: #{tpu_custom_call.1} parent=1 // pred_check_branch
      %46 = sbr.rel (0) target = $region17
    $region16: #{tpu_custom_call.1} parent=1 // pred_region
      _
    $region17: #{tpu_custom_call.1} parent=1 // pred_fallthru
      _
    // Predicated region
    $region18: #{tpu_custom_call.1} parent=1 // pred_check
      _
    $region19: #{tpu_custom_call.1} parent=1 // pred_check_branch
      %48 = sbr.rel (0) target = $region21
    $region20: #{tpu_custom_call.1} parent=1 // pred_region
      %s50 = ssub.s32 16, 16
      %51 = vsyncadd [#allocation10], %s50
      %s53 = sshll.u32 [#allocation9], 4
      %s54 = int_to_ptr.vmem [resolvable:$true] %s53
      %56 = dma.hbm_to_vmem [thread:$0]  %s4, 16, %s54, [#allocation10]
    $region21: #{tpu_custom_call.1} parent=1 // pred_fallthru
      _
    // Predicated region
    $region22: #{tpu_custom_call.1} parent=1 // pred_check
      _
    $region23: #{tpu_custom_call.1} parent=1 // pred_check_branch
      %58 = sbr.rel (0) target = $region25
    $region24: #{tpu_custom_call.1} parent=1 // pred_region
      _
    $region25: #{tpu_custom_call.1} parent=1 // pred_fallthru
      _
    // Predicated region
    $region26: #{tpu_custom_call.1} parent=1 // pred_check
      _
    $region27: #{tpu_custom_call.1} parent=1 // pred_check_branch
      %60 = sbr.rel (0) target = $region29
    $region28: #{tpu_custom_call.1} parent=1 // pred_region
      _
    $region29: #{tpu_custom_call.1} parent=1 // pred_fallthru
      _
    // Predicated region
    $region30: #{tpu_custom_call.1} parent=1 // pred_check
      _
    $region31: #{tpu_custom_call.1} parent=1 // pred_check_branch
      %62 = sbr.rel (0) target = $region33
    $region32: #{tpu_custom_call.1} parent=1 // pred_region
      _
    $region33: #{tpu_custom_call.1} parent=1 // pred_fallthru
      _
    // Predicated region
    $region34: #{tpu_custom_call.1} parent=1 // pred_check
      _
    $region35: #{tpu_custom_call.1} parent=1 // pred_check_branch
      %64 = sbr.rel (0) target = $region37
    $region36: #{tpu_custom_call.1} parent=1 // pred_region
      %65 = dma.done [#allocation5], 256
    $region37: #{tpu_custom_call.1} parent=1 // pred_fallthru
      _
    // Predicated region
    $region38: #{tpu_custom_call.1} parent=1 // pred_check
      _
    $region39: #{tpu_custom_call.1} parent=1 // pred_check_branch
      %67 = sbr.rel (0) target = $region41
    $region40: #{tpu_custom_call.1} parent=1 // pred_region
      %68 = dma.done [#allocation7], 16
    $region41: #{tpu_custom_call.1} parent=1 // pred_fallthru
      _
    // Predicated region
    $region42: #{tpu_custom_call.1} parent=1 // pred_check
      _
    $region43: #{tpu_custom_call.1} parent=1 // pred_check_branch
      %70 = sbr.rel (0) target = $region45
    $region44: #{tpu_custom_call.1} parent=1 // pred_region
      %71 = dma.done [#allocation10], 16
    $region45: #{tpu_custom_call.1} parent=1 // pred_fallthru
      _
    %72 = sfence
    %v73 = vld [vmem:[#allocation4] sm:$0xff]
    %v74 = vld [vmem:[#allocation4 + $0x8] sm:$0xff]
    %v77 = vcombine.high %v73, %v73
    %v78 = vcombine.high %v74, %v74
    %vm81 = vcmask 1043456
    %v82 = vsel %vm81, %v73, 0.0
    %v83 = vsel %vm81, %v77, 0.0
    %v84 = vadd.f32 %v82, %v83
    %85 = vadd.xlane.f32.xlu0 %v84
    %v86 = vpop.xlane.xlu0 %85
    %v87 = vsel %vm81, %v74, 0.0
    %v88 = vsel %vm81, %v78, 0.0
    %v89 = vadd.f32 %v87, %v88
    %90 = vadd.xlane.f32.xlu0 %v89
    %v91 = vpop.xlane.xlu0 %90
    %p92 = scmp.eq.s32.totalorder 0, 0
    // Predicated region
    $region46: #{tpu_custom_call.1} parent=1 // pred_check
      %p93 = pneg %p92
    $region47: #{tpu_custom_call.1} parent=1 // pred_check_branch
      %95 = sbr.rel (%p93) target = $region49
    $region48: #{tpu_custom_call.1} parent=1 // pred_region
      %v98 = vlaneseq
      %v99 = vand.u32 %v98, 127
      %v100 = vlaneseq
      %v101 = vshrl.u32 %v100, 7
      %v102 = vsub.s32 %v99, %v101
      %v103 = vrot.slane %v86, %v102
      %v104 = vlaneseq
      %v105 = vshrl.u32 %v104, 7
      %v106 = vsub.s32 %v99, %v105
      %v107 = vrot.slane %v91, %v106
      %vm108 = vcmask 1041409
      %v109 = vsel %vm108, %v107, %v103
      %vm111 = vcmask 25600
      %112 = vst.msk [vmem:[#allocation2] sm:$0x3] %vm111, %v109
    $region49: #{tpu_custom_call.1} parent=1 // pred_fallthru
      _
    %p113 = scmp.gt.s32.totalorder 0, 0
    // Predicated region
    $region50: #{tpu_custom_call.1} parent=1 // pred_check
      %p114 = pneg %p113
    $region51: #{tpu_custom_call.1} parent=1 // pred_check_branch
      %116 = sbr.rel (%p114) target = $region53
    $region52: #{tpu_custom_call.1} parent=1 // pred_region
      %v117 = vld [vmem:[#allocation2] sm:$0x3]
      %v120 = vlaneseq
      %v121 = vand.u32 %v120, 127
      %v122 = vlaneseq
      %v123 = vshrl.u32 %v122, 7
      %v124 = vsub.s32 %v121, %v123
      %v125 = vrot.slane %v86, %v124
      %v126 = vlaneseq
      %v127 = vshrl.u32 %v126, 7
      %v128 = vsub.s32 %v121, %v127
      %v129 = vrot.slane %v91, %v128
      %vm130 = vcmask 1041409
      %v131 = vsel %vm130, %v129, %v125
      %v133 = vadd.f32 %v117, %v131
      %vm134 = vcmask 25600
      %135 = vst.msk [vmem:[#allocation2] sm:$0x3] %vm134, %v133
    $region53: #{tpu_custom_call.1} parent=1 // pred_fallthru
      _
    // Predicated region
    $region54: #{tpu_custom_call.1} parent=1 // pred_check
      %p136 = pneg %p92
    $region55: #{tpu_custom_call.1} parent=1 // pred_check_branch
      %138 = sbr.rel (%p136) target = $region57
    $region56: #{tpu_custom_call.1} parent=1 // pred_region
      %v139 = vld [vmem:[#allocation2] sm:$0x3]
      %v140 = vmul.f32 %v139, 0.00390625
      %v141 = vld [vmem:[%s1] sm:$0x3]
      %s142 = sld [smem:[#allocation8]]
      %v143 = vstv %s142
      %v144 = vmul.f32 %v143, %v140
      %s145 = sld [smem:[#allocation8 + $0x1]]
      %v146 = vstv %s145
      %v147 = vmul.f32 %v146, %v141
      %v148 = vadd.f32 %v144, %v147
      %s149 = sld [smem:[#allocation3]]
      %v150 = vstv %s149
      %v151 = vadd.f32 %v148, %v150
      %vm152 = vcmask 25600
      %v153 = vsel %vm152, %v151, 0.0
      %154 = vadd.xlane.f32.xlu0 %v153
      %v155 = vpop.xlane.xlu0 %154
      %v156 = vrcp.pop 4.0
      %v157 = vmul.f32 %v155, %v156
      %v158 = vsub.f32 %v151, %v157
      %v159 = vmul.f32 %v158, %v158
      %v160 = vsel %vm152, %v159, 0.0
      %161 = vadd.xlane.f32.xlu0 %v160
      %v162 = vpop.xlane.xlu0 %161
      %v163 = vmul.f32 %v162, %v156
      %v164 = vadd.f32 %v163, 1e-05
      %v165 = vrsqrt.pop %v164
      %v166 = vmul.f32 %v158, %v165
      %v167 = vld [vmem:[#allocation9] sm:$0x1]
      %v169 = vlaneseq
      %v170 = vshrl.u32 %v169, 7
      %v171 = vsub.s32 0, %v170
      %v172 = vrot.slane %v167, %v171
      %v174 = vmul.f32 %v166, %v172
      %v175 = vld [vmem:[%s5] sm:$0x1]
      %v177 = vlaneseq
      %v178 = vshrl.u32 %v177, 7
      %v179 = vsub.s32 0, %v178
      %v180 = vrot.slane %v175, %v179
      %v182 = vadd.f32 %v174, %v180
      %v183 = vmax.f32 %v182, 0.0
      %v184 = vld [vmem:[%s6] sm:$0xf]
      %v185 = vld [vmem:[%s7] sm:$0x1]
      %v187 = vlaneseq
      %v188 = vshrl.u32 %v187, 7
      %v189 = vsub.s32 0, %v188
      %v190 = vrot.slane %v185, %v189
      %vm192 = vcmask 31744
      %v194 = vsel %vm192, %v183, 0
      %v197 = vsel %vm81, %v184, 0
      %199 = vmatprep.subr.mxu0 0.0
      %200 = vmatpush1.msra.mxu0 0.0
      %201 = vmatprep.subr.mxu0 0.0
      %202 = vmatpush1.msra.mxu0 0.0
      %203 = vmatprep.subr.mxu0 0.0
      %204 = vmatpush1.msra.mxu0 0.0
      %205 = vmatprep.subr.mxu0 0.0
      %206 = vmatpush1.msra.mxu0 0.0
      %207 = vmatprep.subr.mxu0 0.0
      %208 = vmatpush1.msra.mxu0 0.0
      %209 = vmatprep.subr.mxu0 0.0
      %210 = vmatpush1.msra.mxu0 0.0
      %211 = vmatprep.subr.mxu0 0.0
      %212 = vmatpush1.msra.mxu0 0.0
      %213 = vmatprep.subr.mxu0 0.0
      %214 = vmatpush1.msra.mxu0 0.0
      %215 = vmatprep.subr.mxu0 0.0
      %216 = vmatpush1.msra.mxu0 0.0
      %217 = vmatprep.subr.mxu0 0.0
      %218 = vmatpush1.msra.mxu0 0.0
      %219 = vmatprep.subr.mxu0 0.0
      %220 = vmatpush1.msra.mxu0 0.0
      %221 = vmatprep.subr.mxu0 0.0
      %222 = vmatpush1.msra.mxu0 0.0
      %223 = vmatprep.subr.mxu0 0.0
      %224 = vmatpush1.msra.mxu0 0.0
      %225 = vmatprep.subr.mxu0 0.0
      %226 = vmatpush1.msra.mxu0 0.0
      %227 = vmatprep.subr.mxu0 0.0
      %228 = vmatpush1.msra.mxu0 0.0
      %229 = vmatprep.subr.mxu0 0.0
      %230 = vmatpush1.msra.mxu0 %v197
      %231 = vmatprep.subr.mxu0 0.0
      %232 = vmatpush2.msra.mxu0 0.0
      %233 = vmatprep.subr.mxu0 0.0
      %234 = vmatpush2.msra.mxu0 0.0
      %235 = vmatprep.subr.mxu0 0.0
      %236 = vmatpush2.msra.mxu0 0.0
      %237 = vmatprep.subr.mxu0 0.0
      %238 = vmatpush2.msra.mxu0 0.0
      %239 = vmatprep.subr.mxu0 0.0
      %240 = vmatpush2.msra.mxu0 0.0
      %241 = vmatprep.subr.mxu0 0.0
      %242 = vmatpush2.msra.mxu0 0.0
      %243 = vmatprep.subr.mxu0 0.0
      %244 = vmatpush2.msra.mxu0 0.0
      %245 = vmatprep.subr.mxu0 0.0
      %246 = vmatpush2.msra.mxu0 0.0
      %247 = vmatprep.subr.mxu0 0.0
      %248 = vmatpush2.msra.mxu0 0.0
      %249 = vmatprep.subr.mxu0 0.0
      %250 = vmatpush2.msra.mxu0 0.0
      %251 = vmatprep.subr.mxu0 0.0
      %252 = vmatpush2.msra.mxu0 0.0
      %253 = vmatprep.subr.mxu0 0.0
      %254 = vmatpush2.msra.mxu0 0.0
      %255 = vmatprep.subr.mxu0 0.0
      %256 = vmatpush2.msra.mxu0 0.0
      %257 = vmatprep.subr.mxu0 0.0
      %258 = vmatpush2.msra.mxu0 0.0
      %259 = vmatprep.subr.mxu0 0.0
      %260 = vmatpush2.msra.mxu0 0.0
      %261 = vmatprep.subr.mxu0 0.0
      %262 = vmatpush2.msra.mxu0 0.0
      %263 = vmatprep.mubr.f32.mxu0 0.0
      %264 = vmatmul.mubr.f32.gmra.mxu0 %v194
      %v265 = vpop.f32.mrf.mxu0
      %v266 = vadd.f32 %v190, %v265
      %v267 = vpop.f32.mrf.mxu0
      %268 = vdwg.mxu0
      %v269 = vxor.u32 %v266, 2147483648
      %v270 = vmul.f32 %v269, 1.442695
      %v271 = vpow.pop %v270
      %v272 = vadd.f32 %v271, 1.0
      %v273 = vrcp.pop %v272
      %v274 = vmul.f32 1.0, %v273
      %275 = vst.msk [vmem:[#allocation11] sm:$0x3] %vm152, %v274
      %v276 = vmul.f32 %v140, %v274
      %277 = vst.msk [vmem:[#allocation12] sm:$0x3] %vm152, %v276
    $region57: #{tpu_custom_call.1} parent=1 // pred_fallthru
      _
    // Predicated region
    $region58: #{tpu_custom_call.1} parent=1 // pred_check
      _
    $region59: #{tpu_custom_call.1} parent=1 // pred_check_branch
      %279 = sbr.rel (0) target = $region61
    $region60: #{tpu_custom_call.1} parent=1 // pred_region
      %s281 = ssub.s32 32, 32
      %282 = vsyncadd [#allocation6], %s281
      %s284 = sshll.u32 [#allocation11], 4
      %s285 = int_to_ptr.vmem [resolvable:$true] %s284
      %287 = dma.vmem_to_hbm [thread:$0]  %s285, 32, %s8, [#allocation6]
    $region61: #{tpu_custom_call.1} parent=1 // pred_fallthru
      _
    // Predicated region
    $region62: #{tpu_custom_call.1} parent=1 // pred_check
      _
    $region63: #{tpu_custom_call.1} parent=1 // pred_check_branch
      %289 = sbr.rel (0) target = $region65
    $region64: #{tpu_custom_call.1} parent=1 // pred_region
      %s291 = ssub.s32 32, 32
      %292 = vsyncadd [#allocation13], %s291
      %s294 = sshll.u32 [#allocation12], 4
      %s295 = int_to_ptr.vmem [resolvable:$true] %s294
      %297 = dma.vmem_to_hbm [thread:$0]  %s295, 32, %s9, [#allocation13]
    $region65: #{tpu_custom_call.1} parent=1 // pred_fallthru
      _
    // Predicated region
    $region66: #{tpu_custom_call.1} parent=1 // pred_check
      _
    $region67: #{tpu_custom_call.1} parent=1 // pred_check_branch
      %299 = sbr.rel (0) target = $region69
    $region68: #{tpu_custom_call.1} parent=1 // pred_region
      %300 = dma.done [#allocation6], 32
    $region69: #{tpu_custom_call.1} parent=1 // pred_fallthru
      _
    // Predicated region
    $region70: #{tpu_custom_call.1} parent=1 // pred_check
      _
    $region71: #{tpu_custom_call.1} parent=1 // pred_check_branch
      %302 = sbr.rel (0) target = $region73
    $region72: #{tpu_custom_call.1} parent=1 // pred_region
      %303 = dma.done [#allocation13], 32
    $region73: #{tpu_custom_call.1} parent=1 // pred_fallthru
      _
    %304 = vsyncpa [#allocation5], 1
    %305 = vsyncpa [#allocation10], 1
    %306 = vsyncpa [#allocation6], 1
    %307 = vsyncpa [#allocation13], 1
    %308 = vsyncpa [#allocation7], 1

</llo_original>
